<compile_context>
chip_gen: v5e
topology: v5e:2x2
jax: 0.10.0
libtpu: 0.0.40
codegen_flags: <defaults>
</compile_context>

<pallas_src>
import jax
import jax.numpy as jnp
from jax.experimental import pallas as pl
from jax.experimental.pallas import tpu as pltpu


_LANE = 128
_SMALL_INPUT_BYTES = 512 * 1024           # below this, plain XLA wins (launch overhead)
_MEGACORE_SPLIT_BYTES = 4 * 1024 * 1024   # only split single-block grids at/above this size


def _sublane_pack(dtype) -> int:
    """Sublane packing for a dtype: 8 (4-byte), 16 (2-byte), 32 (1-byte)."""
    itemsize = jnp.dtype(dtype).itemsize
    return max(8, 32 // max(1, itemsize))


def _uap_add_kernel(x_ref, uap_ref, o_ref):
    # x_ref / o_ref: (tile_n, tile_f) rows of the flattened (N, C*H*W) view.
    # uap_ref:       (1, tile_f)      perturbation slice, broadcast over rows.
    # uap is cast in-kernel so the wrapper never materializes a converted copy.
    o_ref[...] = (x_ref[...] + uap_ref[...].astype(x_ref.dtype)).astype(o_ref.dtype)


def _pick_tiles(n_rows, n_feat, itemsize, sublane, budget_bytes, total_bytes):
    """Choose an aligned (tile_n, tile_f) tile of the flattened (n_rows, n_feat) view.

    Invariants (per the (sublane, 128) block constraint):
      * tile_f is the full feature extent OR a multiple of 128;
      * tile_n is the full row extent OR a multiple of `sublane`, never smaller
        than one packed sublane group;
      * tile_n * tile_f * itemsize <= budget_bytes whenever the axis is tiled.
    Ragged edges are left to a cdiv grid (no host-side padding of x).
    """
    # Lane (feature) axis: keep it as wide as the budget allows.
    if n_feat * itemsize * sublane <= budget_bytes:
        tile_f = n_feat                                    # full extent
    else:
        tile_f = max(_LANE,
                     (budget_bytes // (sublane * itemsize)) // _LANE * _LANE)

    # Row (sublane) axis.
    rows_fit = max(1, budget_bytes // (tile_f * itemsize))
    if rows_fit >= n_rows:
        tile_n = n_rows                                    # full extent
    else:
        tile_n = max(sublane, (rows_fit // sublane) * sublane)

    # Megacore (v7x has 2 TensorCores): a large single-block grid would leave
    # one core idle, so split the row axis when there is enough work.
    if (pl.cdiv(n_feat, tile_f) * pl.cdiv(n_rows, tile_n) == 1
            and total_bytes >= _MEGACORE_SPLIT_BYTES
            and n_rows >= 2 * sublane):
        tile_n = pl.cdiv(pl.cdiv(n_rows, 2), sublane) * sublane

    return tile_n, tile_f


def uap_forward(x, uap, *, tile_budget_bytes=4 * 1024 * 1024,
                use_pallas=None, donate_x=False):
    """adv_x = x + uap, with uap (C,H,W) broadcast over the batch dim of x (N,C,H,W)."""
    N, C, H, W = x.shape
    assert uap.shape == (C, H, W), (uap.shape, (C, H, W))
    F = C * H * W
    itemsize = jnp.dtype(x.dtype).itemsize
    total_bytes = N * F * itemsize

    if use_pallas is None:
        use_pallas = total_bytes >= _SMALL_INPUT_BYTES
    if not use_pallas:
        # Tiny inputs: pallas_call fixed cost dominates; XLA fuses the
        # broadcast add anyway.  Same dtype semantics as the kernel path.
        return x + uap[None].astype(x.dtype)

    x2 = x.reshape(N, F)
    u2 = uap.reshape(1, F)                 # dtype cast happens inside the kernel

    sublane = _sublane_pack(x.dtype)
    tile_n, tile_f = _pick_tiles(N, F, itemsize, sublane,
                                 tile_budget_bytes, total_bytes)

    # Feature axis outer, rows inner: uap's block index (0, f) is constant
    # across the inner axis, so it is fetched once per column strip and stays
    # resident in VMEM while the batch rows stream through.
    grid = (pl.cdiv(F, tile_f), pl.cdiv(N, tile_n))

    tile_bytes = tile_n * tile_f * itemsize
    # Double-buffered x + out plus a small resident uap strip.  Cap at 48 MiB
    # (v7x has 64 MiB VMEM per core); floor at 32 MiB so v5e's 16 MiB scoped
    # default never throttles pipelining.
    vmem_limit = int(min(48 * 1024 * 1024, max(32 * 1024 * 1024, 5 * tile_bytes)))

    out2 = pl.pallas_call(
        _uap_add_kernel,
        out_shape=jax.ShapeDtypeStruct((N, F), x.dtype),
        grid_spec=pl.GridSpec(
            grid=grid,
            in_specs=[
                pl.BlockSpec((tile_n, tile_f), lambda f, n: (n, f)),
                pl.BlockSpec((1, tile_f), lambda f, n: (0, f)),
            ],
            out_specs=pl.BlockSpec((tile_n, tile_f), lambda f, n: (n, f)),
        ),
        compiler_params=pltpu.CompilerParams(
            dimension_semantics=("parallel", "parallel"),
            vmem_limit_bytes=vmem_limit,
        ),
        input_output_aliases=({0: 0} if donate_x else {}),
    )(x2, u2)

    return out2.reshape(N, C, H, W)


class UAP:
    """JAX/Pallas port of the PyTorch UAP module."""

    def __init__(self, shape=(32, 32), num_channels=3, mean=None, std=None):
        self.num_channels = num_channels
        self.shape = shape
        if mean is None:
            mean = [0.0] * num_channels
        if std is None:
            std = [1.0] * num_channels

        # nn.Parameter(torch.zeros(num_channels, *shape)) — deterministic init.
        self.uap = jnp.zeros((num_channels, *shape), dtype=jnp.float32)

        # mean_tensor / std_tensor of shape (1, C, H, W): kept for parity with
        # __init__, though they cancel out of the returned value (the
        # normalize/denormalize chain in the PyTorch forward is dead code).
        self.mean_tensor = (
            jnp.ones((1, num_channels, *shape), dtype=jnp.float32)
            * jnp.asarray(mean, dtype=jnp.float32)[None, :, None, None]
        )
        self.std_tensor = (
            jnp.ones((1, num_channels, *shape), dtype=jnp.float32)
            * jnp.asarray(std, dtype=jnp.float32)[None, :, None, None]
        )

    def __call__(self, x, **kwargs):
        return uap_forward(x, self.uap, **kwargs)


if __name__ == "__main__":
    key = jax.random.PRNGKey(0)

    # --- toy case (2,4,16,16): force the Pallas path so the kernel is run ----
    N, C, H, W = 2, 4, 16, 16
    k_x, k_u, k_x2, k_u2 = jax.random.split(key, 4)
    x = jax.random.normal(k_x, (N, C, H, W), dtype=jnp.float32)

    model = UAP(shape=(H, W), num_channels=C, mean=[0.0] * C, std=[1.0] * C)
    # Give the perturbation a non-trivial deterministic value so the add is
    # actually exercised (the module initializes it to zeros).
    model.uap = 0.1 * jax.random.normal(k_u, (C, H, W), dtype=jnp.float32)

    adv_x = model(x, use_pallas=True)
    adv_x = jax.block_until_ready(adv_x)

    ref = x + model.uap[None]
    assert adv_x.shape == (N, C, H, W)
    assert adv_x.dtype == x.dtype
    assert jnp.allclose(adv_x, ref, atol=1e-6), "mismatch vs reference (toy case)"

    # --- tiled / ragged-edge path: odd N, small tile budget -> (2,2) grid ----
    N2, C2, H2, W2 = 10, 4, 24, 24
    x_big = jax.random.normal(k_x2, (N2, C2, H2, W2), dtype=jnp.float32)
    uap_big = 0.05 * jax.random.normal(k_u2, (C2, H2, W2), dtype=jnp.float32)
    out_big = uap_forward(x_big, uap_big, tile_budget_bytes=64 * 1024,
                          use_pallas=True)
    out_big = jax.block_until_ready(out_big)
    assert jnp.allclose(out_big, x_big + uap_big[None], atol=1e-6), \
        "mismatch vs reference (tiled case)"

    # --- bf16 activations + f32 uap: in-kernel cast, output stays bf16 -------
    x_bf16 = x.astype(jnp.bfloat16)
    out_bf16 = uap_forward(x_bf16, model.uap, use_pallas=True)
    out_bf16 = jax.block_until_ready(out_bf16)
    ref_bf16 = x_bf16 + model.uap[None].astype(jnp.bfloat16)
    assert out_bf16.dtype == jnp.bfloat16
    assert jnp.allclose(out_bf16.astype(jnp.float32),
                        ref_bf16.astype(jnp.float32), atol=1e-2), \
        "mismatch vs reference (bf16 case)"

    print("KERNEL_OK")
</pallas_src>

<mosaic_0001>
module attributes {stable_mosaic.version = 11 : i64} {
  func.func @_uap_add_kernel(%arg0: i32, %arg1: i32, %arg2: memref<2x1024xf32, #tpu.memory_space<vmem>>, %arg3: memref<1x1024xf32, #tpu.memory_space<vmem>>, %arg4: memref<2x1024xf32, #tpu.memory_space<vmem>>) attributes {dimension_semantics = [#tpu.dimension_semantics<parallel>, #tpu.dimension_semantics<parallel>], iteration_bounds = array<i64: 1, 1>, scalar_prefetch = 0 : i64, scratch_operands = 0 : i64, tpu.core_type = #tpu.core_type<tc>, window_params = [{transform_indices = @transform_0, window_bounds = array<i64: 2, 1024>}, {transform_indices = @transform_1, window_bounds = array<i64: 1, 1024>}, {transform_indices = @transform_2, window_bounds = array<i64: 2, 1024>}]} {
    %c0 = arith.constant 0 : index
    %c0_0 = arith.constant 0 : index
    %0 = vector.load %arg2[%c0, %c0_0] : memref<2x1024xf32, #tpu.memory_space<vmem>>, vector<2x1024xf32>
    %c0_1 = arith.constant 0 : index
    %c0_2 = arith.constant 0 : index
    %1 = vector.load %arg3[%c0_1, %c0_2] : memref<1x1024xf32, #tpu.memory_space<vmem>>, vector<1x1024xf32>
    %2 = vector.broadcast %1 : vector<1x1024xf32> to vector<2x1024xf32>
    %3 = arith.addf %0, %2 : vector<2x1024xf32>
    %c0_3 = arith.constant 0 : index
    %c0_4 = arith.constant 0 : index
    %4 = vector.load %arg4[%c0_3, %c0_4] : memref<2x1024xf32, #tpu.memory_space<vmem>>, vector<2x1024xf32>
    tpu.vector_store %arg4[%c0_3, %c0_4], %3 {strides = array<i32>} : memref<2x1024xf32, #tpu.memory_space<vmem>>, vector<2x1024xf32>,
    return
  }
  func.func @transform_0(%arg0: i32, %arg1: i32) -> (i32, i32) {
    %c0_i32 = arith.constant 0 : i32
    return %arg1, %arg0 : i32, i32
  }
  func.func @transform_1(%arg0: i32, %arg1: i32) -> (i32, i32) {
    %c0_i32 = arith.constant 0 : i32
    %c0_i32_0 = arith.constant 0 : i32
    return %c0_i32, %arg0 : i32, i32
  }
  func.func @transform_2(%arg0: i32, %arg1: i32) -> (i32, i32) {
    %c0_i32 = arith.constant 0 : i32
    return %arg1, %arg0 : i32, i32
  }
}

</mosaic_0001>

<llo_original>
// kernel: tpu_custom_call.1
$region0: #{tpu_custom_call.1}
  #allocation0 [shape = 'u32[]', space=smem, size = 0x4, offset = 0x4, fixed_abs, tag = 'smem constant byte address 0x4 - core index']
  #allocation1 [shape = 'u32[72,128]{1,0:T(1,128)}', space=vmem, size = 0x9000, scoped, tag = 'internal scratch']
  %s0 = inlined_call_operand.hbm [shape: f32[2,1024], index: 0, kind: input, shape index: {}]
  %s1 = inlined_call_operand.hbm [shape: f32[1,1024], index: 1, kind: input, shape index: {}]
  %s2 = inlined_call_operand.hbm [shape: f32[2,1024], index: 2, kind: output, shape index: {}]
  %s3 = sld [smem:[#allocation0]]
  $region26: #{tpu_custom_call.1} parent=0
    _
  %s5 = ssub.s32 1, %s3
  %s6 = scalar_select 0, %s5, %s3
  $region1: #{tpu_custom_call.1} parent=0
    #allocation2 [shape = 'u8[8192]{0}', space=vmem, size = 0x2000, scoped, tag = 'input window, operand 0, single buffered']
    #allocation3 [shape = 's32[1]{0}', space=sflag, size = 0x4, scoped, tag = 'scoped memory for tpu_custom_call.1']
    #allocation4 [shape = 's32[1]{0}', space=sflag, size = 0x4, scoped, tag = 'scoped memory for tpu_custom_call.1']
    #allocation5 [shape = 'u8[4096]{0}', space=vmem, size = 0x1000, scoped, tag = 'input window, operand 1, single buffered']
    #allocation6 [shape = 's32[1]{0}', space=sflag, size = 0x4, scoped, tag = 'scoped memory for tpu_custom_call.1']
    #allocation7 [shape = 'u8[8192]{0}', space=vmem, size = 0x2000, scoped, tag = 'output window, operand 0, single buffered']
    %7 = vsyncpa [#allocation3], 0
    %8 = vsyncpa [#allocation6], 0
    %9 = vsyncpa [#allocation4], 0
    // Predicated region
    $region2: #{tpu_custom_call.1} parent=1 // pred_check
      _
    $region3: #{tpu_custom_call.1} parent=1 // pred_check_branch
      %11 = sbr.rel (0) target = $region5
    $region4: #{tpu_custom_call.1} parent=1 // pred_region
      %13 = vsyncadd [#allocation3], 0
      %s15 = sshll.u32 %s0, 4
      %s16 = int_to_ptr.hbm [resolvable:$true] %s15
      %s17 = sshll.u32 [#allocation2], 4
      %s18 = int_to_ptr.vmem [resolvable:$true] %s17
      %20 = dma.hbm_to_vmem [thread:$0]  %s16, 256, %s18, [#allocation3]
    $region5: #{tpu_custom_call.1} parent=1 // pred_fallthru
      _
    // Predicated region
    $region6: #{tpu_custom_call.1} parent=1 // pred_check
      _
    $region7: #{tpu_custom_call.1} parent=1 // pred_check_branch
      %22 = sbr.rel (0) target = $region9
    $region8: #{tpu_custom_call.1} parent=1 // pred_region
      %24 = vsyncadd [#allocation6], 0
      %s26 = sshll.u32 %s1, 4
      %s27 = int_to_ptr.hbm [resolvable:$true] %s26
      %s28 = sshll.u32 [#allocation5], 4
      %s29 = int_to_ptr.vmem [resolvable:$true] %s28
      %31 = dma.hbm_to_vmem [thread:$0]  %s27, 128, %s29, [#allocation6]
    $region9: #{tpu_custom_call.1} parent=1 // pred_fallthru
      _
    // Predicated region
    $region10: #{tpu_custom_call.1} parent=1 // pred_check
      _
    $region11: #{tpu_custom_call.1} parent=1 // pred_check_branch
      %33 = sbr.rel (0) target = $region13
    $region12: #{tpu_custom_call.1} parent=1 // pred_region
      %35 = dma.done [#allocation3], 256
    $region13: #{tpu_custom_call.1} parent=1 // pred_fallthru
      _
    // Predicated region
    $region14: #{tpu_custom_call.1} parent=1 // pred_check
      _
    $region15: #{tpu_custom_call.1} parent=1 // pred_check_branch
      %37 = sbr.rel (0) target = $region17
    $region16: #{tpu_custom_call.1} parent=1 // pred_region
      %39 = dma.done [#allocation6], 128
    $region17: #{tpu_custom_call.1} parent=1 // pred_fallthru
      _
    %v40 = vld [vmem:[#allocation2] sm:$0xff]
    %v41 = vld [vmem:[#allocation2 + $0x8] sm:$0xff]
    %v42 = vld [vmem:[#allocation5] sm:$0xff]
    %v44 = vperm.slane %v42, 0
    %v45 = vperm.slane %v42, 1
    %v46 = vperm.slane %v42, 2
    %v47 = vperm.slane %v42, 3
    %v48 = vperm.slane %v42, 4
    %v49 = vperm.slane %v42, 5
    %v50 = vperm.slane %v42, 6
    %v51 = vperm.slane %v42, 7
    %v52 = vrot.slane %v45, 6
    %v53 = vrot.slane %v46, 4
    %v54 = vrot.slane %v47, 2
    %v55 = vrot.slane %v49, 6
    %v56 = vrot.slane %v50, 4
    %v57 = vrot.slane %v51, 2
    %vm58 = vcmask 1041408
    %v59 = vsel %vm58, %v44, %v52
    %vm60 = vcmask 1045508
    %v61 = vsel %vm60, %v53, %v54
    %vm62 = vcmask 1043456
    %v63 = vsel %vm62, %v59, %v61
    %v64 = vsel %vm58, %v48, %v55
    %v65 = vsel %vm60, %v56, %v57
    %v66 = vsel %vm62, %v64, %v65
    %v69 = vadd.f32 %v40, %v63
    %v70 = vadd.f32 %v41, %v66
    %71 = vst [vmem:[#allocation7] sm:$0xff] %v69
    %72 = vst [vmem:[#allocation7 + $0x8] sm:$0xff] %v70
    // Predicated region
    $region18: #{tpu_custom_call.1} parent=1 // pred_check
      _
    $region19: #{tpu_custom_call.1} parent=1 // pred_check_branch
      %74 = sbr.rel (0) target = $region21
    $region20: #{tpu_custom_call.1} parent=1 // pred_region
      %76 = vsyncadd [#allocation4], 0
      %s78 = sshll.u32 [#allocation7], 4
      %s79 = int_to_ptr.vmem [resolvable:$true] %s78
      %s80 = sshll.u32 %s2, 4
      %s81 = int_to_ptr.hbm [resolvable:$true] %s80
      %83 = dma.vmem_to_hbm [thread:$0]  %s79, 256, %s81, [#allocation4]
    $region21: #{tpu_custom_call.1} parent=1 // pred_fallthru
      _
    // Predicated region
    $region22: #{tpu_custom_call.1} parent=1 // pred_check
      _
    $region23: #{tpu_custom_call.1} parent=1 // pred_check_branch
      %85 = sbr.rel (0) target = $region25
    $region24: #{tpu_custom_call.1} parent=1 // pred_region
      %87 = dma.done [#allocation4], 256
    $region25: #{tpu_custom_call.1} parent=1 // pred_fallthru
      _
    %88 = vsyncpa [#allocation3], 1
    %89 = vsyncpa [#allocation6], 1
    %90 = vsyncpa [#allocation4], 1

</llo_original>
